<compile_context>
chip_gen: v7x
topology: tpu7x:2x2x1
jax: 0.10.0
libtpu: 0.0.40
codegen_flags: <defaults>
</compile_context>

<pallas_src>
import jax
import jax.numpy as jnp
from jax.experimental import pallas as pl
from jax.experimental.pallas import tpu as pltpu

H1 = 128          # hidden layer 1 width (already lane-aligned)
H2 = 32           # hidden layer 2 width (model semantics)
H2_PAD = 128      # padded hidden-2 width used inside the kernel
HEAD_PAD = 128    # fused (policy + value) head width, padded to one lane group


def _round_up(x, m):
    return (x + m - 1) // m * m


def _mlp_kernel(x_ref, w1_ref, b1_ref, w2_ref, b2_ref, wh_ref, bh_ref, out_ref):
    # x: (TILE_B, D_pad) uint8 -> bf16 (integers 0..255 are exact in bf16).
    # The 1/255 obs scale is pre-folded into w1.
    x = x_ref[...].astype(jnp.bfloat16)

    # Layer 1: (TILE_B, D_pad) @ (D_pad, 128) -> f32 acc, +bias, ReLU
    h1 = jnp.dot(x, w1_ref[...], preferred_element_type=jnp.float32) + b1_ref[...]
    h1 = jnp.maximum(h1, 0.0).astype(jnp.bfloat16)

    # Layer 2 (padded to 128 cols; pad cols are exactly zero): ReLU
    h2 = jnp.dot(h1, w2_ref[...], preferred_element_type=jnp.float32) + b2_ref[...]
    h2 = jnp.maximum(h2, 0.0).astype(jnp.bfloat16)

    # Fused heads: columns [0:num_outputs] = policy, [num_outputs] = value,
    # remaining columns are zero padding (sliced off in the wrapper).
    out_ref[...] = (
        jnp.dot(h2, wh_ref[...], preferred_element_type=jnp.float32) + bh_ref[...]
    )


def prepare_params(params):
    """Fold /255 into w1, fuse policy+value heads, zero-pad to lane-aligned
    shapes, cast weights to bf16 (biases stay f32)."""
    obs_dim = params["w1"].shape[0]
    num_outputs = params["wp"].shape[1]
    d_pad = _round_up(obs_dim, 128)

    w1 = params["w1"] / 255.0                                       # (D, 128)
    w1 = jnp.pad(w1, ((0, d_pad - obs_dim), (0, 0)))                # (D_pad, 128)
    b1 = params["b1"].reshape(1, H1)

    w2 = jnp.pad(params["w2"], ((0, 0), (0, H2_PAD - H2)))          # (128, 128)
    b2 = jnp.pad(params["b2"].reshape(1, H2), ((0, 0), (0, H2_PAD - H2)))

    head = num_outputs + 1
    wh = jnp.concatenate([params["wp"], params["wv"]], axis=1)      # (32, no+1)
    bh = jnp.concatenate(
        [params["bp"].reshape(1, -1), params["bv"].reshape(1, -1)], axis=1)
    wh = jnp.pad(wh, ((0, H2_PAD - H2), (0, HEAD_PAD - head)))      # (128, 128)
    bh = jnp.pad(bh, ((0, 0), (0, HEAD_PAD - head)))                # (1, 128)

    return dict(
        w1=w1.astype(jnp.bfloat16), b1=b1.astype(jnp.float32),
        w2=w2.astype(jnp.bfloat16), b2=b2.astype(jnp.float32),
        wh=wh.astype(jnp.bfloat16), bh=bh.astype(jnp.float32),
        num_outputs=num_outputs, d_pad=d_pad,
    )


def simple_mlp_forward(obs, prep, *, max_tile_b=512):
    """obs: (B, C, H, W) uint8. Returns (policy (B, num_outputs), value (B,))."""
    B = obs.shape[0]
    x = obs.reshape(B, -1)                      # nn.Flatten(start_dim=1), stays uint8
    D = x.shape[1]
    d_pad = prep["d_pad"]
    num_outputs = prep["num_outputs"]

    # uint8 packs 32 rows per sublane group; keep batch tiles a multiple of 32.
    tile_b = min(max_tile_b, _round_up(B, 32))
    b_pad = _round_up(B, tile_b)
    x = jnp.pad(x, ((0, b_pad - B), (0, d_pad - D)))

    grid = (b_pad // tile_b,)

    def weight_spec(shape):
        return pl.BlockSpec(shape, lambda i: (0, 0))   # VMEM-resident across grid

    out = pl.pallas_call(
        _mlp_kernel,
        out_shape=jax.ShapeDtypeStruct((b_pad, HEAD_PAD), jnp.float32),
        grid=grid,
        in_specs=[
            pl.BlockSpec((tile_b, d_pad), lambda i: (i, 0)),   # x batch tile (uint8)
            weight_spec((d_pad, H1)),      # w1 (bf16, scale folded in)
            weight_spec((1, H1)),          # b1
            weight_spec((H1, H2_PAD)),     # w2 (padded)
            weight_spec((1, H2_PAD)),      # b2 (padded)
            weight_spec((H2_PAD, HEAD_PAD)),  # fused head weights (padded)
            weight_spec((1, HEAD_PAD)),       # fused head bias (padded)
        ],
        out_specs=pl.BlockSpec((tile_b, HEAD_PAD), lambda i: (i, 0)),
        compiler_params=pltpu.CompilerParams(
            dimension_semantics=("parallel",)),   # shards across TCs on v7x
    )(x, prep["w1"], prep["b1"], prep["w2"], prep["b2"], prep["wh"], prep["bh"])

    policy = out[:B, :num_outputs]
    value = out[:B, num_outputs]                 # value_function() -> flattened
    return policy, value


def init_params(key, obs_dim, num_outputs):
    """Deterministic f32 init matching the module's layer shapes (x @ W layout)."""
    ks = jax.random.split(key, 8)

    def lin(kw, kb, fan_in, fan_out):
        lim = 1.0 / jnp.sqrt(fan_in)
        w = jax.random.uniform(kw, (fan_in, fan_out), jnp.float32, -lim, lim)
        b = jax.random.uniform(kb, (1, fan_out), jnp.float32, -lim, lim)
        return w, b

    w1, b1 = lin(ks[0], ks[1], obs_dim, H1)
    w2, b2 = lin(ks[2], ks[3], H1, H2)
    wp, bp = lin(ks[4], ks[5], H2, num_outputs)
    wv, bv = lin(ks[6], ks[7], H2, 1)
    return dict(w1=w1, b1=b1, w2=w2, b2=b2, wp=wp, bp=bp, wv=wv, bv=bv)


def reference_forward(obs, params):
    B = obs.shape[0]
    x = obs.reshape(B, -1).astype(jnp.float32) / 255.0
    h1 = jnp.maximum(x @ params["w1"] + params["b1"], 0.0)
    h2 = jnp.maximum(h1 @ params["w2"] + params["b2"], 0.0)
    policy = h2 @ params["wp"] + params["bp"]
    value = (h2 @ params["wv"] + params["bv"]).reshape(-1)
    return policy, value


if __name__ == "__main__":
    key = jax.random.PRNGKey(0)
    k_obs, k_params = jax.random.split(key)

    # Small shapes consistent with the module: image-like obs (B, C, H, W), 8 actions.
    B, C, H, W = 2, 4, 16, 16
    num_outputs = 8
    obs_dim = C * H * W

    obs = jax.random.randint(k_obs, (B, C, H, W), 0, 256, dtype=jnp.int32).astype(jnp.uint8)
    params = init_params(k_params, obs_dim, num_outputs)
    prep = prepare_params(params)

    policy, value = simple_mlp_forward(obs, prep)
    policy = jax.block_until_ready(policy)
    value = jax.block_until_ready(value)

    # Correctness check against a pure-JAX f32 reference (bf16 weights -> looser tol).
    ref_policy, ref_value = reference_forward(obs, params)
    assert policy.shape == (B, num_outputs)
    assert value.shape == (B,)
    assert jnp.allclose(policy, ref_policy, atol=5e-2, rtol=5e-2), (
        float(jnp.max(jnp.abs(policy - ref_policy))))
    assert jnp.allclose(value, ref_value, atol=5e-2, rtol=5e-2), (
        float(jnp.max(jnp.abs(value - ref_value))))

    print("KERNEL_OK")
</pallas_src>

<mosaic_0001>
module attributes {stable_mosaic.version = 11 : i64} {
  func.func @_mlp_kernel(%arg0: i32, %arg1: memref<32x1024xi8, #tpu.memory_space<vmem>>, %arg2: memref<1024x128xbf16, #tpu.memory_space<vmem>>, %arg3: memref<1x128xf32, #tpu.memory_space<vmem>>, %arg4: memref<128x128xbf16, #tpu.memory_space<vmem>>, %arg5: memref<1x128xf32, #tpu.memory_space<vmem>>, %arg6: memref<128x128xbf16, #tpu.memory_space<vmem>>, %arg7: memref<1x128xf32, #tpu.memory_space<vmem>>, %arg8: memref<32x128xf32, #tpu.memory_space<vmem>>) attributes {dimension_semantics = [#tpu.dimension_semantics<parallel>], iteration_bounds = array<i64: 1>, scalar_prefetch = 0 : i64, scratch_operands = 0 : i64, tpu.core_type = #tpu.core_type<tc>, window_params = [{transform_indices = @transform_0, window_bounds = array<i64: 32, 1024>}, {pipeline_mode = #tpu.pipeline_mode<synchronous>, transform_indices = @transform_1, window_bounds = array<i64: 1024, 128>}, {pipeline_mode = #tpu.pipeline_mode<synchronous>, transform_indices = @transform_2, window_bounds = array<i64: 1, 128>}, {pipeline_mode = #tpu.pipeline_mode<synchronous>, transform_indices = @transform_3, window_bounds = array<i64: 128, 128>}, {pipeline_mode = #tpu.pipeline_mode<synchronous>, transform_indices = @transform_4, window_bounds = array<i64: 1, 128>}, {pipeline_mode = #tpu.pipeline_mode<synchronous>, transform_indices = @transform_5, window_bounds = array<i64: 128, 128>}, {pipeline_mode = #tpu.pipeline_mode<synchronous>, transform_indices = @transform_6, window_bounds = array<i64: 1, 128>}, {transform_indices = @transform_7, window_bounds = array<i64: 32, 128>}]} {
    %c0 = arith.constant 0 : index
    %c0_0 = arith.constant 0 : index
    %0 = vector.load %arg1[%c0, %c0_0] : memref<32x1024xi8, #tpu.memory_space<vmem>>, vector<32x1024xi8>
    %1 = arith.uitofp %0 : vector<32x1024xi8> to vector<32x1024xbf16>
    %c0_1 = arith.constant 0 : index
    %c0_2 = arith.constant 0 : index
    %2 = vector.load %arg2[%c0_1, %c0_2] : memref<1024x128xbf16, #tpu.memory_space<vmem>>, vector<1024x128xbf16>
    %cst = arith.constant dense<0.000000e+00> : vector<32x128xf32>
    %3 = tpu.matmul %1, %2, %cst {dimension_numbers = #tpu.dot_dimension_numbers<[1], [0], [0], [1], [0, 0, 1, 1], [], []>} : vector<32x1024xbf16>, vector<1024x128xbf16>, vector<32x128xf32> -> vector<32x128xf32>
    %c0_3 = arith.constant 0 : index
    %c0_4 = arith.constant 0 : index
    %4 = vector.load %arg3[%c0_3, %c0_4] : memref<1x128xf32, #tpu.memory_space<vmem>>, vector<1x128xf32>
    %5 = vector.broadcast %4 : vector<1x128xf32> to vector<32x128xf32>
    %6 = arith.addf %3, %5 : vector<32x128xf32>
    %cst_5 = arith.constant 0.000000e+00 : f32
    %7 = vector.broadcast %cst_5 : f32 to vector<32x128xf32>
    %8 = arith.maximumf %6, %7 : vector<32x128xf32>
    %9 = arith.truncf %8 : vector<32x128xf32> to vector<32x128xbf16>
    %c0_6 = arith.constant 0 : index
    %c0_7 = arith.constant 0 : index
    %10 = vector.load %arg4[%c0_6, %c0_7] : memref<128x128xbf16, #tpu.memory_space<vmem>>, vector<128x128xbf16>
    %cst_8 = arith.constant dense<0.000000e+00> : vector<32x128xf32>
    %11 = tpu.matmul %9, %10, %cst_8 {dimension_numbers = #tpu.dot_dimension_numbers<[1], [0], [0], [1], [0, 0, 1, 1], [], []>} : vector<32x128xbf16>, vector<128x128xbf16>, vector<32x128xf32> -> vector<32x128xf32>
    %c0_9 = arith.constant 0 : index
    %c0_10 = arith.constant 0 : index
    %12 = vector.load %arg5[%c0_9, %c0_10] : memref<1x128xf32, #tpu.memory_space<vmem>>, vector<1x128xf32>
    %13 = vector.broadcast %12 : vector<1x128xf32> to vector<32x128xf32>
    %14 = arith.addf %11, %13 : vector<32x128xf32>
    %cst_11 = arith.constant 0.000000e+00 : f32
    %15 = vector.broadcast %cst_11 : f32 to vector<32x128xf32>
    %16 = arith.maximumf %14, %15 : vector<32x128xf32>
    %17 = arith.truncf %16 : vector<32x128xf32> to vector<32x128xbf16>
    %c0_12 = arith.constant 0 : index
    %c0_13 = arith.constant 0 : index
    %18 = vector.load %arg6[%c0_12, %c0_13] : memref<128x128xbf16, #tpu.memory_space<vmem>>, vector<128x128xbf16>
    %cst_14 = arith.constant dense<0.000000e+00> : vector<32x128xf32>
    %19 = tpu.matmul %17, %18, %cst_14 {dimension_numbers = #tpu.dot_dimension_numbers<[1], [0], [0], [1], [0, 0, 1, 1], [], []>} : vector<32x128xbf16>, vector<128x128xbf16>, vector<32x128xf32> -> vector<32x128xf32>
    %c0_15 = arith.constant 0 : index
    %c0_16 = arith.constant 0 : index
    %20 = vector.load %arg7[%c0_15, %c0_16] : memref<1x128xf32, #tpu.memory_space<vmem>>, vector<1x128xf32>
    %21 = vector.broadcast %20 : vector<1x128xf32> to vector<32x128xf32>
    %22 = arith.addf %19, %21 : vector<32x128xf32>
    %c0_17 = arith.constant 0 : index
    %c0_18 = arith.constant 0 : index
    %23 = vector.load %arg8[%c0_17, %c0_18] : memref<32x128xf32, #tpu.memory_space<vmem>>, vector<32x128xf32>
    tpu.vector_store %arg8[%c0_17, %c0_18], %22 {strides = array<i32>} : memref<32x128xf32, #tpu.memory_space<vmem>>, vector<32x128xf32>,
    return
  }
  func.func @transform_0(%arg0: i32) -> (i32, i32) {
    %c0_i32 = arith.constant 0 : i32
    %c0_i32_0 = arith.constant 0 : i32
    return %arg0, %c0_i32 : i32, i32
  }
  func.func @transform_1(%arg0: i32) -> (i32, i32) {
    %c0_i32 = arith.constant 0 : i32
    %c0_i32_0 = arith.constant 0 : i32
    %c0_i32_1 = arith.constant 0 : i32
    return %c0_i32, %c0_i32_0 : i32, i32
  }
  func.func @transform_2(%arg0: i32) -> (i32, i32) {
    %c0_i32 = arith.constant 0 : i32
    %c0_i32_0 = arith.constant 0 : i32
    %c0_i32_1 = arith.constant 0 : i32
    return %c0_i32, %c0_i32_0 : i32, i32
  }
  func.func @transform_3(%arg0: i32) -> (i32, i32) {
    %c0_i32 = arith.constant 0 : i32
    %c0_i32_0 = arith.constant 0 : i32
    %c0_i32_1 = arith.constant 0 : i32
    return %c0_i32, %c0_i32_0 : i32, i32
  }
  func.func @transform_4(%arg0: i32) -> (i32, i32) {
    %c0_i32 = arith.constant 0 : i32
    %c0_i32_0 = arith.constant 0 : i32
    %c0_i32_1 = arith.constant 0 : i32
    return %c0_i32, %c0_i32_0 : i32, i32
  }
  func.func @transform_5(%arg0: i32) -> (i32, i32) {
    %c0_i32 = arith.constant 0 : i32
    %c0_i32_0 = arith.constant 0 : i32
    %c0_i32_1 = arith.constant 0 : i32
    return %c0_i32, %c0_i32_0 : i32, i32
  }
  func.func @transform_6(%arg0: i32) -> (i32, i32) {
    %c0_i32 = arith.constant 0 : i32
    %c0_i32_0 = arith.constant 0 : i32
    %c0_i32_1 = arith.constant 0 : i32
    return %c0_i32, %c0_i32_0 : i32, i32
  }
  func.func @transform_7(%arg0: i32) -> (i32, i32) {
    %c0_i32 = arith.constant 0 : i32
    %c0_i32_0 = arith.constant 0 : i32
    return %arg0, %c0_i32 : i32, i32
  }
}

</mosaic_0001>

<llo_original>
// kernel: tpu_custom_call.1
$region0: #{tpu_custom_call.1}
  #allocation0 [shape = 'u32[]', space=smem, size = 0x4, offset = 0x4, fixed_abs, tag = 'smem constant byte address 0x4 - core index']
  #allocation1 [shape = 'u32[144,128]{1,0:T(1,128)}', space=vmem, size = 0x12000, scoped, tag = 'internal scratch']
  %s0 = inlined_call_operand.hbm [shape: u8[32,1024], index: 0, kind: input, shape index: {}]
  %s1 = inlined_call_operand.hbm [shape: bf16[1024,128], index: 1, kind: input, shape index: {}]
  %s2 = inlined_call_operand.vmem [shape: f32[1,128], index: 2, kind: input, shape index: {}]
  %s3 = inlined_call_operand.hbm [shape: bf16[128,128], index: 3, kind: input, shape index: {}]
  %s4 = inlined_call_operand.vmem [shape: f32[1,128], index: 4, kind: input, shape index: {}]
  %s5 = inlined_call_operand.hbm [shape: bf16[128,128], index: 5, kind: input, shape index: {}]
  %s6 = inlined_call_operand.vmem [shape: f32[1,128], index: 6, kind: input, shape index: {}]
  %s7 = inlined_call_operand.hbm [shape: f32[32,128], index: 7, kind: output, shape index: {}]
  %s8 = sld [smem:[#allocation0]]
  $region54: #{tpu_custom_call.1} parent=0
    _
  %s10 = ssub.s32 1, %s8
  %s11 = scalar_select 0, %s10, %s8
  $region1: #{tpu_custom_call.1} parent=0
    #allocation2 [shape = 'u8[32768]{0}', space=vmem, size = 0x8000, scoped, tag = 'input window, operand 0, single buffered']
    #allocation3 [shape = 's32[1]{0}', space=sflag, size = 0x4, scoped, tag = 'scoped memory for tpu_custom_call.1']
    #allocation4 [shape = 's32[1]{0}', space=sflag, size = 0x4, scoped, tag = 'scoped memory for tpu_custom_call.1']
    #allocation5 [shape = 'u8[262144]{0}', space=vmem, size = 0x40000, scoped, tag = 'input window, operand 1, single buffered']
    #allocation6 [shape = 's32[1]{0}', space=sflag, size = 0x4, scoped, tag = 'scoped memory for tpu_custom_call.1']
    #allocation7 [shape = 'u8[32768]{0}', space=vmem, size = 0x8000, scoped, tag = 'input window, operand 3, single buffered']
    #allocation8 [shape = 'u8[32768]{0}', space=vmem, size = 0x8000, scoped, tag = 'input window, operand 5, single buffered']
    #allocation9 [shape = 's32[1]{0}', space=sflag, size = 0x4, scoped, tag = 'scoped memory for tpu_custom_call.1']
    #allocation10 [shape = 'u8[16384]{0}', space=vmem, size = 0x4000, scoped, tag = 'output window, operand 0, single buffered']
    %12 = vsyncpa [#allocation3], 0
    %13 = vsyncpa [#allocation6], 0
    %14 = vsyncpa [#allocation9], 0
    %15 = vsyncpa [#allocation4], 0
    // Predicated region
    $region2: #{tpu_custom_call.1} parent=1 // pred_check
      _
    $region3: #{tpu_custom_call.1} parent=1 // pred_check_branch
      %17 = sbr.rel (0) target = $region5
    $region4: #{tpu_custom_call.1} parent=1 // pred_region
      %s19 = ssub.s32 1024, 1024
      %20 = vsyncadd [#allocation3], %s19
      %s22 = sshll.u32 [#allocation2], 4
      %s23 = int_to_ptr.vmem [resolvable:$true] %s22
      %25 = dma.hbm_to_vmem [thread:$0]  %s0, 1024, %s23, [#allocation3]
    $region5: #{tpu_custom_call.1} parent=1 // pred_fallthru
      _
    // Predicated region
    $region6: #{tpu_custom_call.1} parent=1 // pred_check
      _
    $region7: #{tpu_custom_call.1} parent=1 // pred_check_branch
      %27 = sbr.rel (0) target = $region9
    $region8: #{tpu_custom_call.1} parent=1 // pred_region
      %s29 = ssub.s32 8192, 8192
      %30 = vsyncadd [#allocation6], %s29
      %s31 = sshll.u32 [#allocation5], 4
      %s32 = int_to_ptr.vmem [resolvable:$true] %s31
      %37 = dma.hbm_to_vmem [thread:$0]  %s1, 8192, %s32, [#allocation6], 64, 64, 4
    $region9: #{tpu_custom_call.1} parent=1 // pred_fallthru
      _
    // Predicated region
    $region10: #{tpu_custom_call.1} parent=1 // pred_check
      _
    $region11: #{tpu_custom_call.1} parent=1 // pred_check_branch
      %39 = sbr.rel (0) target = $region13
    $region12: #{tpu_custom_call.1} parent=1 // pred_region
      _
    $region13: #{tpu_custom_call.1} parent=1 // pred_fallthru
      _
    // Predicated region
    $region14: #{tpu_custom_call.1} parent=1 // pred_check
      _
    $region15: #{tpu_custom_call.1} parent=1 // pred_check_branch
      %41 = sbr.rel (0) target = $region17
    $region16: #{tpu_custom_call.1} parent=1 // pred_region
      %s43 = ssub.s32 1024, 1024
      %44 = vsyncadd [#allocation6], %s43
      %s45 = sshll.u32 [#allocation7], 4
      %s46 = int_to_ptr.vmem [resolvable:$true] %s45
      %51 = dma.hbm_to_vmem [thread:$0]  %s3, 1024, %s46, [#allocation6], 64, 64, 4
    $region17: #{tpu_custom_call.1} parent=1 // pred_fallthru
      _
    // Predicated region
    $region18: #{tpu_custom_call.1} parent=1 // pred_check
      _
    $region19: #{tpu_custom_call.1} parent=1 // pred_check_branch
      %53 = sbr.rel (0) target = $region21
    $region20: #{tpu_custom_call.1} parent=1 // pred_region
      _
    $region21: #{tpu_custom_call.1} parent=1 // pred_fallthru
      _
    // Predicated region
    $region22: #{tpu_custom_call.1} parent=1 // pred_check
      _
    $region23: #{tpu_custom_call.1} parent=1 // pred_check_branch
      %55 = sbr.rel (0) target = $region25
    $region24: #{tpu_custom_call.1} parent=1 // pred_region
      %s57 = ssub.s32 1024, 1024
      %58 = vsyncadd [#allocation9], %s57
      %s59 = sshll.u32 [#allocation8], 4
      %s60 = int_to_ptr.vmem [resolvable:$true] %s59
      %65 = dma.hbm_to_vmem [thread:$0]  %s5, 1024, %s60, [#allocation9], 64, 64, 4
    $region25: #{tpu_custom_call.1} parent=1 // pred_fallthru
      _
    // Predicated region
    $region26: #{tpu_custom_call.1} parent=1 // pred_check
      _
    $region27: #{tpu_custom_call.1} parent=1 // pred_check_branch
      %67 = sbr.rel (0) target = $region29
    $region28: #{tpu_custom_call.1} parent=1 // pred_region
      _
    $region29: #{tpu_custom_call.1} parent=1 // pred_fallthru
      _
    // Predicated region
    $region30: #{tpu_custom_call.1} parent=1 // pred_check
      _
    $region31: #{tpu_custom_call.1} parent=1 // pred_check_branch
      %69 = sbr.rel (0) target = $region33
    $region32: #{tpu_custom_call.1} parent=1 // pred_region
      %70 = dma.done [#allocation3], 1024
    $region33: #{tpu_custom_call.1} parent=1 // pred_fallthru
      _
    // Predicated region
    $region34: #{tpu_custom_call.1} parent=1 // pred_check
      _
    $region35: #{tpu_custom_call.1} parent=1 // pred_check_branch
      %72 = sbr.rel (0) target = $region37
    $region36: #{tpu_custom_call.1} parent=1 // pred_region
      %73 = dma.done [#allocation6], 8192
    $region37: #{tpu_custom_call.1} parent=1 // pred_fallthru
      _
    // Predicated region
    $region38: #{tpu_custom_call.1} parent=1 // pred_check
      _
    $region39: #{tpu_custom_call.1} parent=1 // pred_check_branch
      %75 = sbr.rel (0) target = $region41
    $region40: #{tpu_custom_call.1} parent=1 // pred_region
      %76 = dma.done [#allocation6], 1024
    $region41: #{tpu_custom_call.1} parent=1 // pred_fallthru
      _
    // Predicated region
    $region42: #{tpu_custom_call.1} parent=1 // pred_check
      _
    $region43: #{tpu_custom_call.1} parent=1 // pred_check_branch
      %78 = sbr.rel (0) target = $region45
    $region44: #{tpu_custom_call.1} parent=1 // pred_region
      %79 = dma.done [#allocation9], 1024
    $region45: #{tpu_custom_call.1} parent=1 // pred_fallthru
      _
    %v81 = vld [vmem:[#allocation2] sm:$0xff]
    %v82 = vld [vmem:[#allocation2 + $0x8] sm:$0xff]
    %v83 = vld [vmem:[#allocation2 + $0x10] sm:$0xff]
    %v84 = vld [vmem:[#allocation2 + $0x18] sm:$0xff]
    %v85 = vld [vmem:[#allocation2 + $0x20] sm:$0xff]
    %v86 = vld [vmem:[#allocation2 + $0x28] sm:$0xff]
    %v87 = vld [vmem:[#allocation2 + $0x30] sm:$0xff]
    %v88 = vld [vmem:[#allocation2 + $0x38] sm:$0xff]
    %v89 = vunpack.c.l.u8.bf16 %v81
    %v90 = vunpack.c.l.u8.bf16 %v82
    %v91 = vunpack.c.l.u8.bf16 %v83
    %v92 = vunpack.c.l.u8.bf16 %v84
    %v93 = vunpack.c.l.u8.bf16 %v85
    %v94 = vunpack.c.l.u8.bf16 %v86
    %v95 = vunpack.c.l.u8.bf16 %v87
    %v96 = vunpack.c.l.u8.bf16 %v88
    %v97 = vunpack.c.h.u8.bf16 %v81
    %v98 = vunpack.c.h.u8.bf16 %v82
    %v99 = vunpack.c.h.u8.bf16 %v83
    %v100 = vunpack.c.h.u8.bf16 %v84
    %v101 = vunpack.c.h.u8.bf16 %v85
    %v102 = vunpack.c.h.u8.bf16 %v86
    %v103 = vunpack.c.h.u8.bf16 %v87
    %v104 = vunpack.c.h.u8.bf16 %v88
    %v105 = vld [vmem:[#allocation5] sm:$0xf]
    %v106 = vld [vmem:[#allocation5 + $0x4] sm:$0xf]
    %v107 = vld [vmem:[#allocation5 + $0x8] sm:$0xf]
    %v108 = vld [vmem:[#allocation5 + $0xc] sm:$0xf]
    %v109 = vld [vmem:[#allocation5 + $0x10] sm:$0xf]
    %v110 = vld [vmem:[#allocation5 + $0x14] sm:$0xf]
    %v111 = vld [vmem:[#allocation5 + $0x18] sm:$0xf]
    %v112 = vld [vmem:[#allocation5 + $0x1c] sm:$0xf]
    %v113 = vld [vmem:[#allocation5 + $0x20] sm:$0xf]
    %v114 = vld [vmem:[#allocation5 + $0x24] sm:$0xf]
    %v115 = vld [vmem:[#allocation5 + $0x28] sm:$0xf]
    %v116 = vld [vmem:[#allocation5 + $0x2c] sm:$0xf]
    %v117 = vld [vmem:[#allocation5 + $0x30] sm:$0xf]
    %v118 = vld [vmem:[#allocation5 + $0x34] sm:$0xf]
    %v119 = vld [vmem:[#allocation5 + $0x38] sm:$0xf]
    %v120 = vld [vmem:[#allocation5 + $0x3c] sm:$0xf]
    %v121 = vld [vmem:[#allocation5 + $0x40] sm:$0xf]
    %v122 = vld [vmem:[#allocation5 + $0x44] sm:$0xf]
    %v123 = vld [vmem:[#allocation5 + $0x48] sm:$0xf]
    %v124 = vld [vmem:[#allocation5 + $0x4c] sm:$0xf]
    %v125 = vld [vmem:[#allocation5 + $0x50] sm:$0xf]
    %v126 = vld [vmem:[#allocation5 + $0x54] sm:$0xf]
    %v127 = vld [vmem:[#allocation5 + $0x58] sm:$0xf]
    %v128 = vld [vmem:[#allocation5 + $0x5c] sm:$0xf]
    %v129 = vld [vmem:[#allocation5 + $0x60] sm:$0xf]
    %v130 = vld [vmem:[#allocation5 + $0x64] sm:$0xf]
    %v131 = vld [vmem:[#allocation5 + $0x68] sm:$0xf]
    %v132 = vld [vmem:[#allocation5 + $0x6c] sm:$0xf]
    %v133 = vld [vmem:[#allocation5 + $0x70] sm:$0xf]
    %v134 = vld [vmem:[#allocation5 + $0x74] sm:$0xf]
    %v135 = vld [vmem:[#allocation5 + $0x78] sm:$0xf]
    %v136 = vld [vmem:[#allocation5 + $0x7c] sm:$0xf]
    %v137 = vld [vmem:[#allocation5 + $0x80] sm:$0xf]
    %v138 = vld [vmem:[#allocation5 + $0x84] sm:$0xf]
    %v139 = vld [vmem:[#allocation5 + $0x88] sm:$0xf]
    %v140 = vld [vmem:[#allocation5 + $0x8c] sm:$0xf]
    %v141 = vld [vmem:[#allocation5 + $0x90] sm:$0xf]
    %v142 = vld [vmem:[#allocation5 + $0x94] sm:$0xf]
    %v143 = vld [vmem:[#allocation5 + $0x98] sm:$0xf]
    %v144 = vld [vmem:[#allocation5 + $0x9c] sm:$0xf]
    %v145 = vld [vmem:[#allocation5 + $0xa0] sm:$0xf]
    %v146 = vld [vmem:[#allocation5 + $0xa4] sm:$0xf]
    %v147 = vld [vmem:[#allocation5 + $0xa8] sm:$0xf]
    %v148 = vld [vmem:[#allocation5 + $0xac] sm:$0xf]
    %v149 = vld [vmem:[#allocation5 + $0xb0] sm:$0xf]
    %v150 = vld [vmem:[#allocation5 + $0xb4] sm:$0xf]
    %v151 = vld [vmem:[#allocation5 + $0xb8] sm:$0xf]
    %v152 = vld [vmem:[#allocation5 + $0xbc] sm:$0xf]
    %v153 = vld [vmem:[#allocation5 + $0xc0] sm:$0xf]
    %v154 = vld [vmem:[#allocation5 + $0xc4] sm:$0xf]
    %v155 = vld [vmem:[#allocation5 + $0xc8] sm:$0xf]
    %v156 = vld [vmem:[#allocation5 + $0xcc] sm:$0xf]
    %v157 = vld [vmem:[#allocation5 + $0xd0] sm:$0xf]
    %v158 = vld [vmem:[#allocation5 + $0xd4] sm:$0xf]
    %v159 = vld [vmem:[#allocation5 + $0xd8] sm:$0xf]
    %v160 = vld [vmem:[#allocation5 + $0xdc] sm:$0xf]
    %v161 = vld [vmem:[#allocation5 + $0xe0] sm:$0xf]
    %v162 = vld [vmem:[#allocation5 + $0xe4] sm:$0xf]
    %v163 = vld [vmem:[#allocation5 + $0xe8] sm:$0xf]
    %v164 = vld [vmem:[#allocation5 + $0xec] sm:$0xf]
    %v165 = vld [vmem:[#allocation5 + $0xf0] sm:$0xf]
    %v166 = vld [vmem:[#allocation5 + $0xf4] sm:$0xf]
    %v167 = vld [vmem:[#allocation5 + $0xf8] sm:$0xf]
    %v168 = vld [vmem:[#allocation5 + $0xfc] sm:$0xf]
    %v169 = vld [vmem:[#allocation5 + $0x100] sm:$0xf]
    %v170 = vld [vmem:[#allocation5 + $0x104] sm:$0xf]
    %v171 = vld [vmem:[#allocation5 + $0x108] sm:$0xf]
    %v172 = vld [vmem:[#allocation5 + $0x10c] sm:$0xf]
    %v173 = vld [vmem:[#allocation5 + $0x110] sm:$0xf]
    %v174 = vld [vmem:[#allocation5 + $0x114] sm:$0xf]
    %v175 = vld [vmem:[#allocation5 + $0x118] sm:$0xf]
    %v176 = vld [vmem:[#allocation5 + $0x11c] sm:$0xf]
    %v177 = vld [vmem:[#allocation5 + $0x120] sm:$0xf]
    %v178 = vld [vmem:[#allocation5 + $0x124] sm:$0xf]
    %v179 = vld [vmem:[#allocation5 + $0x128] sm:$0xf]
    %v180 = vld [vmem:[#allocation5 + $0x12c] sm:$0xf]
    %v181 = vld [vmem:[#allocation5 + $0x130] sm:$0xf]
    %v182 = vld [vmem:[#allocation5 + $0x134] sm:$0xf]
    %v183 = vld [vmem:[#allocation5 + $0x138] sm:$0xf]
    %v184 = vld [vmem:[#allocation5 + $0x13c] sm:$0xf]
    %v185 = vld [vmem:[#allocation5 + $0x140] sm:$0xf]
    %v186 = vld [vmem:[#allocation5 + $0x144] sm:$0xf]
    %v187 = vld [vmem:[#allocation5 + $0x148] sm:$0xf]
    %v188 = vld [vmem:[#allocation5 + $0x14c] sm:$0xf]
    %v189 = vld [vmem:[#allocation5 + $0x150] sm:$0xf]
    %v190 = vld [vmem:[#allocation5 + $0x154] sm:$0xf]
    %v191 = vld [vmem:[#allocation5 + $0x158] sm:$0xf]
    %v192 = vld [vmem:[#allocation5 + $0x15c] sm:$0xf]
    %v193 = vld [vmem:[#allocation5 + $0x160] sm:$0xf]
    %v194 = vld [vmem:[#allocation5 + $0x164] sm:$0xf]
    %v195 = vld [vmem:[#allocation5 + $0x168] sm:$0xf]
    %v196 = vld [vmem:[#allocation5 + $0x16c] sm:$0xf]
    %v197 = vld [vmem:[#allocation5 + $0x170] sm:$0xf]
    %v198 = vld [vmem:[#allocation5 + $0x174] sm:$0xf]
    %v199 = vld [vmem:[#allocation5 + $0x178] sm:$0xf]
    %v200 = vld [vmem:[#allocation5 + $0x17c] sm:$0xf]
    %v201 = vld [vmem:[#allocation5 + $0x180] sm:$0xf]
    %v202 = vld [vmem:[#allocation5 + $0x184] sm:$0xf]
    %v203 = vld [vmem:[#allocation5 + $0x188] sm:$0xf]
    %v204 = vld [vmem:[#allocation5 + $0x18c] sm:$0xf]
    %v205 = vld [vmem:[#allocation5 + $0x190] sm:$0xf]
    %v206 = vld [vmem:[#allocation5 + $0x194] sm:$0xf]
    %v207 = vld [vmem:[#allocation5 + $0x198] sm:$0xf]
    %v208 = vld [vmem:[#allocation5 + $0x19c] sm:$0xf]
    %v209 = vld [vmem:[#allocation5 + $0x1a0] sm:$0xf]
    %v210 = vld [vmem:[#allocation5 + $0x1a4] sm:$0xf]
    %v211 = vld [vmem:[#allocation5 + $0x1a8] sm:$0xf]
    %v212 = vld [vmem:[#allocation5 + $0x1ac] sm:$0xf]
    %v213 = vld [vmem:[#allocation5 + $0x1b0] sm:$0xf]
    %v214 = vld [vmem:[#allocation5 + $0x1b4] sm:$0xf]
    %v215 = vld [vmem:[#allocation5 + $0x1b8] sm:$0xf]
    %v216 = vld [vmem:[#allocation5 + $0x1bc] sm:$0xf]
    %v217 = vld [vmem:[#allocation5 + $0x1c0] sm:$0xf]
    %v218 = vld [vmem:[#allocation5 + $0x1c4] sm:$0xf]
    %v219 = vld [vmem:[#allocation5 + $0x1c8] sm:$0xf]
    %v220 = vld [vmem:[#allocation5 + $0x1cc] sm:$0xf]
    %v221 = vld [vmem:[#allocation5 + $0x1d0] sm:$0xf]
    %v222 = vld [vmem:[#allocation5 + $0x1d4] sm:$0xf]
    %v223 = vld [vmem:[#allocation5 + $0x1d8] sm:$0xf]
    %v224 = vld [vmem:[#allocation5 + $0x1dc] sm:$0xf]
    %v225 = vld [vmem:[#allocation5 + $0x1e0] sm:$0xf]
    %v226 = vld [vmem:[#allocation5 + $0x1e4] sm:$0xf]
    %v227 = vld [vmem:[#allocation5 + $0x1e8] sm:$0xf]
    %v228 = vld [vmem:[#allocation5 + $0x1ec] sm:$0xf]
    %v229 = vld [vmem:[#allocation5 + $0x1f0] sm:$0xf]
    %v230 = vld [vmem:[#allocation5 + $0x1f4] sm:$0xf]
    %v231 = vld [vmem:[#allocation5 + $0x1f8] sm:$0xf]
    %v232 = vld [vmem:[#allocation5 + $0x1fc] sm:$0xf]
    %v233 = vld [vmem:[%s2] sm:$0x1]
    %v235 = vlaneseq
    %v236 = vshrl.u32 %v235, 7
    %v237 = vsub.s32 0, %v236
    %v238 = vrot.slane %v233, %v237
    %v368 = vunpack.c.l.b16 %v105
    %v369 = vunpack.c.l.b16 %v106
    %v370 = vunpack.c.l.b16 %v107
    %v371 = vunpack.c.l.b16 %v108
    %v372 = vunpack.c.l.b16 %v109
    %v373 = vunpack.c.l.b16 %v110
    %v374 = vunpack.c.l.b16 %v111
    %v375 = vunpack.c.l.b16 %v112
    %v376 = vunpack.c.l.b16 %v113
    %v377 = vunpack.c.l.b16 %v114
    %v378 = vunpack.c.l.b16 %v115
    %v379 = vunpack.c.l.b16 %v116
    %v380 = vunpack.c.l.b16 %v117
    %v381 = vunpack.c.l.b16 %v118
    %v382 = vunpack.c.l.b16 %v119
    %v383 = vunpack.c.l.b16 %v120
    %v384 = vunpack.c.l.b16 %v121
    %v385 = vunpack.c.l.b16 %v122
    %v386 = vunpack.c.l.b16 %v123
    %v387 = vunpack.c.l.b16 %v124
    %v388 = vunpack.c.l.b16 %v125
    %v389 = vunpack.c.l.b16 %v126
    %v390 = vunpack.c.l.b16 %v127
    %v391 = vunpack.c.l.b16 %v128
    %v392 = vunpack.c.l.b16 %v129
    %v393 = vunpack.c.l.b16 %v130
    %v394 = vunpack.c.l.b16 %v131
    %v395 = vunpack.c.l.b16 %v132
    %v396 = vunpack.c.l.b16 %v133
    %v397 = vunpack.c.l.b16 %v134
    %v398 = vunpack.c.l.b16 %v135
    %v399 = vunpack.c.l.b16 %v136
    %v400 = vunpack.c.l.b16 %v137
    %v401 = vunpack.c.l.b16 %v138
    %v402 = vunpack.c.l.b16 %v139
    %v403 = vunpack.c.l.b16 %v140
    %v404 = vunpack.c.l.b16 %v141
    %v405 = vunpack.c.l.b16 %v142
    %v406 = vunpack.c.l.b16 %v143
    %v407 = vunpack.c.l.b16 %v144
    %v408 = vunpack.c.l.b16 %v145
    %v409 = vunpack.c.l.b16 %v146
    %v410 = vunpack.c.l.b16 %v147
    %v411 = vunpack.c.l.b16 %v148
    %v412 = vunpack.c.l.b16 %v149
    %v413 = vunpack.c.l.b16 %v150
    %v414 = vunpack.c.l.b16 %v151
    %v415 = vunpack.c.l.b16 %v152
    %v416 = vunpack.c.l.b16 %v153
    %v417 = vunpack.c.l.b16 %v154
    %v418 = vunpack.c.l.b16 %v155
    %v419 = vunpack.c.l.b16 %v156
    %v420 = vunpack.c.l.b16 %v157
    %v421 = vunpack.c.l.b16 %v158
    %v422 = vunpack.c.l.b16 %v159
    %v423 = vunpack.c.l.b16 %v160
    %v424 = vunpack.c.l.b16 %v161
    %v425 = vunpack.c.l.b16 %v162
    %v426 = vunpack.c.l.b16 %v163
    %v427 = vunpack.c.l.b16 %v164
    %v428 = vunpack.c.l.b16 %v165
    %v429 = vunpack.c.l.b16 %v166
    %v430 = vunpack.c.l.b16 %v167
    %v431 = vunpack.c.l.b16 %v168
    %v432 = vunpack.c.l.b16 %v169
    %v433 = vunpack.c.l.b16 %v170
    %v434 = vunpack.c.l.b16 %v171
    %v435 = vunpack.c.l.b16 %v172
    %v436 = vunpack.c.l.b16 %v173
    %v437 = vunpack.c.l.b16 %v174
    %v438 = vunpack.c.l.b16 %v175
    %v439 = vunpack.c.l.b16 %v176
    %v440 = vunpack.c.l.b16 %v177
    %v441 = vunpack.c.l.b16 %v178
    %v442 = vunpack.c.l.b16 %v179
    %v443 = vunpack.c.l.b16 %v180
    %v444 = vunpack.c.l.b16 %v181
    %v445 = vunpack.c.l.b16 %v182
    %v446 = vunpack.c.l.b16 %v183
    %v447 = vunpack.c.l.b16 %v184
    %v448 = vunpack.c.l.b16 %v185
    %v449 = vunpack.c.l.b16 %v186
    %v450 = vunpack.c.l.b16 %v187
    %v451 = vunpack.c.l.b16 %v188
    %v452 = vunpack.c.l.b16 %v189
    %v453 = vunpack.c.l.b16 %v190
    %v454 = vunpack.c.l.b16 %v191
    %v455 = vunpack.c.l.b16 %v192
    %v456 = vunpack.c.l.b16 %v193
    %v457 = vunpack.c.l.b16 %v194
    %v458 = vunpack.c.l.b16 %v195
    %v459 = vunpack.c.l.b16 %v196
    %v460 = vunpack.c.l.b16 %v197
    %v461 = vunpack.c.l.b16 %v198
    %v462 = vunpack.c.l.b16 %v199
    %v463 = vunpack.c.l.b16 %v200
    %v464 = vunpack.c.l.b16 %v201
    %v465 = vunpack.c.l.b16 %v202
    %v466 = vunpack.c.l.b16 %v203
    %v467 = vunpack.c.l.b16 %v204
    %v468 = vunpack.c.l.b16 %v205
    %v469 = vunpack.c.l.b16 %v206
    %v470 = vunpack.c.l.b16 %v207
    %v471 = vunpack.c.l.b16 %v208
    %v472 = vunpack.c.l.b16 %v209
    %v473 = vunpack.c.l.b16 %v210
    %v474 = vunpack.c.l.b16 %v211
    %v475 = vunpack.c.l.b16 %v212
    %v476 = vunpack.c.l.b16 %v213
    %v477 = vunpack.c.l.b16 %v214
    %v478 = vunpack.c.l.b16 %v215
    %v479 = vunpack.c.l.b16 %v216
    %v480 = vunpack.c.l.b16 %v217
    %v481 = vunpack.c.l.b16 %v218
    %v482 = vunpack.c.l.b16 %v219
    %v483 = vunpack.c.l.b16 %v220
    %v484 = vunpack.c.l.b16 %v221
    %v485 = vunpack.c.l.b16 %v222
    %v486 = vunpack.c.l.b16 %v223
    %v487 = vunpack.c.l.b16 %v224
    %v488 = vunpack.c.l.b16 %v225
    %v489 = vunpack.c.l.b16 %v226
    %v490 = vunpack.c.l.b16 %v227
    %v491 = vunpack.c.l.b16 %v228
    %v492 = vunpack.c.l.b16 %v229
    %v493 = vunpack.c.l.b16 %v230
    %v494 = vunpack.c.l.b16 %v231
    %v495 = vunpack.c.l.b16 %v232
    %v496 = vpack.c.b16 %v369, %v368
    %v497 = vpack.c.b16 %v371, %v370
    %v498 = vpack.c.b16 %v373, %v372
    %v499 = vpack.c.b16 %v375, %v374
    %v500 = vpack.c.b16 %v377, %v376
    %v501 = vpack.c.b16 %v379, %v378
    %v502 = vpack.c.b16 %v381, %v380
    %v503 = vpack.c.b16 %v383, %v382
    %v504 = vpack.c.b16 %v385, %v384
    %v505 = vpack.c.b16 %v387, %v386
    %v506 = vpack.c.b16 %v389, %v388
    %v507 = vpack.c.b16 %v391, %v390
    %v508 = vpack.c.b16 %v393, %v392
    %v509 = vpack.c.b16 %v395, %v394
    %v510 = vpack.c.b16 %v397, %v396
    %v511 = vpack.c.b16 %v399, %v398
    %v512 = vpack.c.b16 %v401, %v400
    %v513 = vpack.c.b16 %v403, %v402
    %v514 = vpack.c.b16 %v405, %v404
    %v515 = vpack.c.b16 %v407, %v406
    %v516 = vpack.c.b16 %v409, %v408
    %v517 = vpack.c.b16 %v411, %v410
    %v518 = vpack.c.b16 %v413, %v412
    %v519 = vpack.c.b16 %v415, %v414
    %v520 = vpack.c.b16 %v417, %v416
    %v521 = vpack.c.b16 %v419, %v418
    %v522 = vpack.c.b16 %v421, %v420
    %v523 = vpack.c.b16 %v423, %v422
    %v524 = vpack.c.b16 %v425, %v424
    %v525 = vpack.c.b16 %v427, %v426
    %v526 = vpack.c.b16 %v429, %v428
    %v527 = vpack.c.b16 %v431, %v430
    %v528 = vpack.c.b16 %v433, %v432
    %v529 = vpack.c.b16 %v435, %v434
    %v530 = vpack.c.b16 %v437, %v436
    %v531 = vpack.c.b16 %v439, %v438
    %v532 = vpack.c.b16 %v441, %v440
    %v533 = vpack.c.b16 %v443, %v442
    %v534 = vpack.c.b16 %v445, %v444
    %v535 = vpack.c.b16 %v447, %v446
    %v536 = vpack.c.b16 %v449, %v448
    %v537 = vpack.c.b16 %v451, %v450
    %v538 = vpack.c.b16 %v453, %v452
    %v539 = vpack.c.b16 %v455, %v454
    %v540 = vpack.c.b16 %v457, %v456
    %v541 = vpack.c.b16 %v459, %v458
    %v542 = vpack.c.b16 %v461, %v460
    %v543 = vpack.c.b16 %v463, %v462
    %v544 = vpack.c.b16 %v465, %v464
    %v545 = vpack.c.b16 %v467, %v466
    %v546 = vpack.c.b16 %v469, %v468
    %v547 = vpack.c.b16 %v471, %v470
    %v548 = vpack.c.b16 %v473, %v472
    %v549 = vpack.c.b16 %v475, %v474
    %v550 = vpack.c.b16 %v477, %v476
    %v551 = vpack.c.b16 %v479, %v478
    %v552 = vpack.c.b16 %v481, %v480
    %v553 = vpack.c.b16 %v483, %v482
    %v554 = vpack.c.b16 %v485, %v484
    %v555 = vpack.c.b16 %v487, %v486
    %v556 = vpack.c.b16 %v489, %v488
    %v557 = vpack.c.b16 %v491, %v490
    %v558 = vpack.c.b16 %v493, %v492
    %v559 = vpack.c.b16 %v495, %v494
    %624 = vmatprep.subr.bf16.mxu0 0
    %625 = vmatpush1.bf16.msra.mxu0 %v496
    %626 = vmatprep.subr.bf16.mxu0 0
    %627 = vmatpush1.bf16.msra.mxu0 %v497
    %628 = vmatprep.subr.bf16.mxu0 0
    %629 = vmatpush1.bf16.msra.mxu0 %v498
    %630 = vmatprep.subr.bf16.mxu0 0
    %631 = vmatpush1.bf16.msra.mxu0 %v499
    %632 = vmatprep.subr.bf16.mxu0 0
    %633 = vmatpush1.bf16.msra.mxu0 %v500
    %634 = vmatprep.subr.bf16.mxu0 0
    %635 = vmatpush1.bf16.msra.mxu0 %v501
    %636 = vmatprep.subr.bf16.mxu0 0
    %637 = vmatpush1.bf16.msra.mxu0 %v502
    %638 = vmatprep.subr.bf16.mxu0 0
    %639 = vmatpush1.bf16.msra.mxu0 %v503
    %640 = vmatprep.subr.bf16.mxu0 0
    %641 = vmatpush1.bf16.msra.mxu0 %v504
    %642 = vmatprep.subr.bf16.mxu0 0
    %643 = vmatpush1.bf16.msra.mxu0 %v505
    %644 = vmatprep.subr.bf16.mxu0 0
    %645 = vmatpush1.bf16.msra.mxu0 %v506
    %646 = vmatprep.subr.bf16.mxu0 0
    %647 = vmatpush1.bf16.msra.mxu0 %v507
    %648 = vmatprep.subr.bf16.mxu0 0
    %649 = vmatpush1.bf16.msra.mxu0 %v508
    %650 = vmatprep.subr.bf16.mxu0 0
    %651 = vmatpush1.bf16.msra.mxu0 %v509
    %652 = vmatprep.subr.bf16.mxu0 0
    %653 = vmatpush1.bf16.msra.mxu0 %v510
    %654 = vmatprep.subr.bf16.mxu0 0
    %655 = vmatpush1.bf16.msra.mxu0 %v511
    %656 = vmatprep.mubr.bf16.mxu0 %v90
    %657 = vmatmul.mubr.bf16.gmra.mrb[0].mxu0 %v89
    %v658 = vpop.f32.mrb[0].mxu0
    %v659 = vadd.f32 %v238, %v658
    %v660 = vpop.f32.mrb[0].mxu0
    %v661 = vpop.f32.mrb[0].mxu0
    %v662 = vadd.f32 %v238, %v661
    %v663 = vpop.f32.mrb[0].mxu0
    %664 = vmatprep.mubr.bf16.mxu0 %v98
    %665 = vmatmul.mubr.bf16.gmra.mrb[0].mxu0 %v97
    %v666 = vpop.f32.mrb[0].mxu0
    %v667 = vadd.f32 %v238, %v666
    %v668 = vpop.f32.mrb[0].mxu0
    %v669 = vpop.f32.mrb[0].mxu0
    %v670 = vadd.f32 %v238, %v669
    %v671 = vpop.f32.mrb[0].mxu0
    %672 = vdwg.mxu0
    %673 = vmatprep.subr.bf16.mxu0 0
    %674 = vmatpush1.bf16.msra.mxu0 %v512
    %675 = vmatprep.subr.bf16.mxu0 0
    %676 = vmatpush1.bf16.msra.mxu0 %v513
    %677 = vmatprep.subr.bf16.mxu0 0
    %678 = vmatpush1.bf16.msra.mxu0 %v514
    %679 = vmatprep.subr.bf16.mxu0 0
    %680 = vmatpush1.bf16.msra.mxu0 %v515
    %681 = vmatprep.subr.bf16.mxu0 0
    %682 = vmatpush1.bf16.msra.mxu0 %v516
    %683 = vmatprep.subr.bf16.mxu0 0
    %684 = vmatpush1.bf16.msra.mxu0 %v517
    %685 = vmatprep.subr.bf16.mxu0 0
    %686 = vmatpush1.bf16.msra.mxu0 %v518
    %687 = vmatprep.subr.bf16.mxu0 0
    %688 = vmatpush1.bf16.msra.mxu0 %v519
    %689 = vmatprep.subr.bf16.mxu0 0
    %690 = vmatpush1.bf16.msra.mxu0 %v520
    %691 = vmatprep.subr.bf16.mxu0 0
    %692 = vmatpush1.bf16.msra.mxu0 %v521
    %693 = vmatprep.subr.bf16.mxu0 0
    %694 = vmatpush1.bf16.msra.mxu0 %v522
    %695 = vmatprep.subr.bf16.mxu0 0
    %696 = vmatpush1.bf16.msra.mxu0 %v523
    %697 = vmatprep.subr.bf16.mxu0 0
    %698 = vmatpush1.bf16.msra.mxu0 %v524
    %699 = vmatprep.subr.bf16.mxu0 0
    %700 = vmatpush1.bf16.msra.mxu0 %v525
    %701 = vmatprep.subr.bf16.mxu0 0
    %702 = vmatpush1.bf16.msra.mxu0 %v526
    %703 = vmatprep.subr.bf16.mxu0 0
    %704 = vmatpush1.bf16.msra.mxu0 %v527
    %705 = vmatprep.mubr.bf16.mxu0 %v92
    %706 = vmatmul.mubr.bf16.gmra.mrb[0].mxu0 %v91
    %v707 = vpop.f32.mrb[0].mxu0
    %v708 = vadd.f32 %v659, %v707
    %v709 = vpop.f32.mrb[0].mxu0
    %v710 = vpop.f32.mrb[0].mxu0
    %v711 = vadd.f32 %v662, %v710
    %v712 = vpop.f32.mrb[0].mxu0
    %713 = vmatprep.mubr.bf16.mxu0 %v100
    %714 = vmatmul.mubr.bf16.gmra.mrb[0].mxu0 %v99
    %v715 = vpop.f32.mrb[0].mxu0
    %v716 = vadd.f32 %v667, %v715
    %v717 = vpop.f32.mrb[0].mxu0
    %v718 = vpop.f32.mrb[0].mxu0
    %v719 = vadd.f32 %v670, %v718
    %v720 = vpop.f32.mrb[0].mxu0
    %721 = vdwg.mxu0
    %722 = vmatprep.subr.bf16.mxu0 0
    %723 = vmatpush1.bf16.msra.mxu0 %v528
    %724 = vmatprep.subr.bf16.mxu0 0
    %725 = vmatpush1.bf16.msra.mxu0 %v529
    %726 = vmatprep.subr.bf16.mxu0 0
    %727 = vmatpush1.bf16.msra.mxu0 %v530
    %728 = vmatprep.subr.bf16.mxu0 0
    %729 = vmatpush1.bf16.msra.mxu0 %v531
    %730 = vmatprep.subr.bf16.mxu0 0
    %731 = vmatpush1.bf16.msra.mxu0 %v532
    %732 = vmatprep.subr.bf16.mxu0 0
    %733 = vmatpush1.bf16.msra.mxu0 %v533
    %734 = vmatprep.subr.bf16.mxu0 0
    %735 = vmatpush1.bf16.msra.mxu0 %v534
    %736 = vmatprep.subr.bf16.mxu0 0
    %737 = vmatpush1.bf16.msra.mxu0 %v535
    %738 = vmatprep.subr.bf16.mxu0 0
    %739 = vmatpush1.bf16.msra.mxu0 %v536
    %740 = vmatprep.subr.bf16.mxu0 0
    %741 = vmatpush1.bf16.msra.mxu0 %v537
    %742 = vmatprep.subr.bf16.mxu0 0
    %743 = vmatpush1.bf16.msra.mxu0 %v538
    %744 = vmatprep.subr.bf16.mxu0 0
    %745 = vmatpush1.bf16.msra.mxu0 %v539
    %746 = vmatprep.subr.bf16.mxu0 0
    %747 = vmatpush1.bf16.msra.mxu0 %v540
    %748 = vmatprep.subr.bf16.mxu0 0
    %749 = vmatpush1.bf16.msra.mxu0 %v541
    %750 = vmatprep.subr.bf16.mxu0 0
    %751 = vmatpush1.bf16.msra.mxu0 %v542
    %752 = vmatprep.subr.bf16.mxu0 0
    %753 = vmatpush1.bf16.msra.mxu0 %v543
    %754 = vmatprep.mubr.bf16.mxu0 %v94
    %755 = vmatmul.mubr.bf16.gmra.mrb[0].mxu0 %v93
    %v756 = vpop.f32.mrb[0].mxu0
    %v757 = vadd.f32 %v708, %v756
    %v758 = vpop.f32.mrb[0].mxu0
    %v759 = vpop.f32.mrb[0].mxu0
    %v760 = vadd.f32 %v711, %v759
    %v761 = vpop.f32.mrb[0].mxu0
    %762 = vmatprep.mubr.bf16.mxu0 %v102
    %763 = vmatmul.mubr.bf16.gmra.mrb[0].mxu0 %v101
    %v764 = vpop.f32.mrb[0].mxu0
    %v765 = vadd.f32 %v716, %v764
    %v766 = vpop.f32.mrb[0].mxu0
    %v767 = vpop.f32.mrb[0].mxu0
    %v768 = vadd.f32 %v719, %v767
    %v769 = vpop.f32.mrb[0].mxu0
    %770 = vdwg.mxu0
    %771 = vmatprep.subr.bf16.mxu0 0
    %772 = vmatpush1.bf16.msra.mxu0 %v544
    %773 = vmatprep.subr.bf16.mxu0 0
    %774 = vmatpush1.bf16.msra.mxu0 %v545
    %775 = vmatprep.subr.bf16.mxu0 0
    %776 = vmatpush1.bf16.msra.mxu0 %v546
    %777 = vmatprep.subr.bf16.mxu0 0
    %778 = vmatpush1.bf16.msra.mxu0 %v547
    %779 = vmatprep.subr.bf16.mxu0 0
    %780 = vmatpush1.bf16.msra.mxu0 %v548
    %781 = vmatprep.subr.bf16.mxu0 0
    %782 = vmatpush1.bf16.msra.mxu0 %v549
    %783 = vmatprep.subr.bf16.mxu0 0
    %784 = vmatpush1.bf16.msra.mxu0 %v550
    %785 = vmatprep.subr.bf16.mxu0 0
    %786 = vmatpush1.bf16.msra.mxu0 %v551
    %787 = vmatprep.subr.bf16.mxu0 0
    %788 = vmatpush1.bf16.msra.mxu0 %v552
    %789 = vmatprep.subr.bf16.mxu0 0
    %790 = vmatpush1.bf16.msra.mxu0 %v553
    %791 = vmatprep.subr.bf16.mxu0 0
    %792 = vmatpush1.bf16.msra.mxu0 %v554
    %793 = vmatprep.subr.bf16.mxu0 0
    %794 = vmatpush1.bf16.msra.mxu0 %v555
    %795 = vmatprep.subr.bf16.mxu0 0
    %796 = vmatpush1.bf16.msra.mxu0 %v556
    %797 = vmatprep.subr.bf16.mxu0 0
    %798 = vmatpush1.bf16.msra.mxu0 %v557
    %799 = vmatprep.subr.bf16.mxu0 0
    %800 = vmatpush1.bf16.msra.mxu0 %v558
    %801 = vmatprep.subr.bf16.mxu0 0
    %802 = vmatpush1.bf16.msra.mxu0 %v559
    %803 = vmatprep.mubr.bf16.mxu0 %v96
    %804 = vmatmul.mubr.bf16.gmra.mrb[0].mxu0 %v95
    %v805 = vpop.f32.mrb[0].mxu0
    %v806 = vadd.f32 %v757, %v805
    %v807 = vpop.f32.mrb[0].mxu0
    %v808 = vpop.f32.mrb[0].mxu0
    %v809 = vadd.f32 %v760, %v808
    %v810 = vpop.f32.mrb[0].mxu0
    %811 = vmatprep.mubr.bf16.mxu0 %v104
    %812 = vmatmul.mubr.bf16.gmra.mrb[0].mxu0 %v103
    %v813 = vpop.f32.mrb[0].mxu0
    %v814 = vadd.f32 %v765, %v813
    %v815 = vpop.f32.mrb[0].mxu0
    %v816 = vpop.f32.mrb[0].mxu0
    %v817 = vadd.f32 %v768, %v816
    %v818 = vpop.f32.mrb[0].mxu0
    %819 = vdwg.mxu0
    %v820 = vmax.f32 %v806, 0.0
    %v821 = vmax.f32 %v809, 0.0
    %v822 = vmax.f32 %v814, 0.0
    %v823 = vmax.f32 %v817, 0.0
    %v824 = vpack.c.bf16 %v821, %v820
    %v825 = vpack.c.bf16 %v823, %v822
    %v826 = vld [vmem:[#allocation7] sm:$0xf]
    %v827 = vld [vmem:[#allocation7 + $0x4] sm:$0xf]
    %v828 = vld [vmem:[#allocation7 + $0x8] sm:$0xf]
    %v829 = vld [vmem:[#allocation7 + $0xc] sm:$0xf]
    %v830 = vld [vmem:[#allocation7 + $0x10] sm:$0xf]
    %v831 = vld [vmem:[#allocation7 + $0x14] sm:$0xf]
    %v832 = vld [vmem:[#allocation7 + $0x18] sm:$0xf]
    %v833 = vld [vmem:[#allocation7 + $0x1c] sm:$0xf]
    %v834 = vld [vmem:[#allocation7 + $0x20] sm:$0xf]
    %v835 = vld [vmem:[#allocation7 + $0x24] sm:$0xf]
    %v836 = vld [vmem:[#allocation7 + $0x28] sm:$0xf]
    %v837 = vld [vmem:[#allocation7 + $0x2c] sm:$0xf]
    %v838 = vld [vmem:[#allocation7 + $0x30] sm:$0xf]
    %v839 = vld [vmem:[#allocation7 + $0x34] sm:$0xf]
    %v840 = vld [vmem:[#allocation7 + $0x38] sm:$0xf]
    %v841 = vld [vmem:[#allocation7 + $0x3c] sm:$0xf]
    %v842 = vld [vmem:[%s4] sm:$0x1]
    %v844 = vlaneseq
    %v845 = vshrl.u32 %v844, 7
    %v846 = vsub.s32 0, %v845
    %v847 = vrot.slane %v842, %v846
    %v865 = vunpack.c.l.b16 %v826
    %v866 = vunpack.c.l.b16 %v827
    %v867 = vunpack.c.l.b16 %v828
    %v868 = vunpack.c.l.b16 %v829
    %v869 = vunpack.c.l.b16 %v830
    %v870 = vunpack.c.l.b16 %v831
    %v871 = vunpack.c.l.b16 %v832
    %v872 = vunpack.c.l.b16 %v833
    %v873 = vunpack.c.l.b16 %v834
    %v874 = vunpack.c.l.b16 %v835
    %v875 = vunpack.c.l.b16 %v836
    %v876 = vunpack.c.l.b16 %v837
    %v877 = vunpack.c.l.b16 %v838
    %v878 = vunpack.c.l.b16 %v839
    %v879 = vunpack.c.l.b16 %v840
    %v880 = vunpack.c.l.b16 %v841
    %v881 = vpack.c.b16 %v866, %v865
    %v882 = vpack.c.b16 %v868, %v867
    %v883 = vpack.c.b16 %v870, %v869
    %v884 = vpack.c.b16 %v872, %v871
    %v885 = vpack.c.b16 %v874, %v873
    %v886 = vpack.c.b16 %v876, %v875
    %v887 = vpack.c.b16 %v878, %v877
    %v888 = vpack.c.b16 %v880, %v879
    %897 = vmatprep.subr.bf16.mxu0 0
    %898 = vmatpush1.bf16.msra.mxu0 %v881
    %899 = vmatprep.subr.bf16.mxu0 0
    %900 = vmatpush1.bf16.msra.mxu0 %v882
    %901 = vmatprep.subr.bf16.mxu0 0
    %902 = vmatpush1.bf16.msra.mxu0 %v883
    %903 = vmatprep.subr.bf16.mxu0 0
    %904 = vmatpush1.bf16.msra.mxu0 %v884
    %905 = vmatprep.subr.bf16.mxu0 0
    %906 = vmatpush1.bf16.msra.mxu0 %v885
    %907 = vmatprep.subr.bf16.mxu0 0
    %908 = vmatpush1.bf16.msra.mxu0 %v886
    %909 = vmatprep.subr.bf16.mxu0 0
    %910 = vmatpush1.bf16.msra.mxu0 %v887
    %911 = vmatprep.subr.bf16.mxu0 0
    %912 = vmatpush1.bf16.msra.mxu0 %v888
    %913 = vmatprep.subr.bf16.mxu0 0
    %914 = vmatpush1.bf16.msra.mxu0 0
    %915 = vmatprep.subr.bf16.mxu0 0
    %916 = vmatpush1.bf16.msra.mxu0 0
    %917 = vmatprep.subr.bf16.mxu0 0
    %918 = vmatpush1.bf16.msra.mxu0 0
    %919 = vmatprep.subr.bf16.mxu0 0
    %920 = vmatpush1.bf16.msra.mxu0 0
    %921 = vmatprep.subr.bf16.mxu0 0
    %922 = vmatpush1.bf16.msra.mxu0 0
    %923 = vmatprep.subr.bf16.mxu0 0
    %924 = vmatpush1.bf16.msra.mxu0 0
    %925 = vmatprep.subr.bf16.mxu0 0
    %926 = vmatpush1.bf16.msra.mxu0 0
    %927 = vmatprep.subr.bf16.mxu0 0
    %928 = vmatpush1.bf16.msra.mxu0 0
    %929 = vmatprep.mubr.bf16.mxu0 0
    %930 = vmatmul.mubr.bf16.gmra.mrb[0].mxu0 %v824
    %v931 = vpop.f32.mrb[0].mxu0
    %v932 = vadd.f32 %v847, %v931
    %v933 = vpop.f32.mrb[0].mxu0
    %v934 = vpop.f32.mrb[0].mxu0
    %v935 = vadd.f32 %v847, %v934
    %v936 = vpop.f32.mrb[0].mxu0
    %937 = vmatprep.mubr.bf16.mxu0 0
    %938 = vmatmul.mubr.bf16.gmra.mrb[0].mxu0 %v825
    %v939 = vpop.f32.mrb[0].mxu0
    %v940 = vadd.f32 %v847, %v939
    %v941 = vpop.f32.mrb[0].mxu0
    %v942 = vpop.f32.mrb[0].mxu0
    %v943 = vadd.f32 %v847, %v942
    %v944 = vpop.f32.mrb[0].mxu0
    %945 = vdwg.mxu0
    %v946 = vmax.f32 %v932, 0.0
    %v947 = vmax.f32 %v935, 0.0
    %v948 = vmax.f32 %v940, 0.0
    %v949 = vmax.f32 %v943, 0.0
    %v950 = vpack.c.bf16 %v947, %v946
    %v951 = vpack.c.bf16 %v949, %v948
    %v952 = vld [vmem:[#allocation8] sm:$0xf]
    %v953 = vld [vmem:[#allocation8 + $0x4] sm:$0xf]
    %v954 = vld [vmem:[#allocation8 + $0x8] sm:$0xf]
    %v955 = vld [vmem:[#allocation8 + $0xc] sm:$0xf]
    %v956 = vld [vmem:[#allocation8 + $0x10] sm:$0xf]
    %v957 = vld [vmem:[#allocation8 + $0x14] sm:$0xf]
    %v958 = vld [vmem:[#allocation8 + $0x18] sm:$0xf]
    %v959 = vld [vmem:[#allocation8 + $0x1c] sm:$0xf]
    %v960 = vld [vmem:[#allocation8 + $0x20] sm:$0xf]
    %v961 = vld [vmem:[#allocation8 + $0x24] sm:$0xf]
    %v962 = vld [vmem:[#allocation8 + $0x28] sm:$0xf]
    %v963 = vld [vmem:[#allocation8 + $0x2c] sm:$0xf]
    %v964 = vld [vmem:[#allocation8 + $0x30] sm:$0xf]
    %v965 = vld [vmem:[#allocation8 + $0x34] sm:$0xf]
    %v966 = vld [vmem:[#allocation8 + $0x38] sm:$0xf]
    %v967 = vld [vmem:[#allocation8 + $0x3c] sm:$0xf]
    %v968 = vld [vmem:[%s6] sm:$0x1]
    %v970 = vlaneseq
    %v971 = vshrl.u32 %v970, 7
    %v972 = vsub.s32 0, %v971
    %v973 = vrot.slane %v968, %v972
    %v991 = vunpack.c.l.b16 %v952
    %v992 = vunpack.c.l.b16 %v953
    %v993 = vunpack.c.l.b16 %v954
    %v994 = vunpack.c.l.b16 %v955
    %v995 = vunpack.c.l.b16 %v956
    %v996 = vunpack.c.l.b16 %v957
    %v997 = vunpack.c.l.b16 %v958
    %v998 = vunpack.c.l.b16 %v959
    %v999 = vunpack.c.l.b16 %v960
    %v1000 = vunpack.c.l.b16 %v961
    %v1001 = vunpack.c.l.b16 %v962
    %v1002 = vunpack.c.l.b16 %v963
    %v1003 = vunpack.c.l.b16 %v964
    %v1004 = vunpack.c.l.b16 %v965
    %v1005 = vunpack.c.l.b16 %v966
    %v1006 = vunpack.c.l.b16 %v967
    %v1007 = vpack.c.b16 %v992, %v991
    %v1008 = vpack.c.b16 %v994, %v993
    %v1009 = vpack.c.b16 %v996, %v995
    %v1010 = vpack.c.b16 %v998, %v997
    %v1011 = vpack.c.b16 %v1000, %v999
    %v1012 = vpack.c.b16 %v1002, %v1001
    %v1013 = vpack.c.b16 %v1004, %v1003
    %v1014 = vpack.c.b16 %v1006, %v1005
    %1023 = vmatprep.subr.bf16.mxu0 0
    %1024 = vmatpush1.bf16.msra.mxu0 %v1007
    %1025 = vmatprep.subr.bf16.mxu0 0
    %1026 = vmatpush1.bf16.msra.mxu0 %v1008
    %1027 = vmatprep.subr.bf16.mxu0 0
    %1028 = vmatpush1.bf16.msra.mxu0 %v1009
    %1029 = vmatprep.subr.bf16.mxu0 0
    %1030 = vmatpush1.bf16.msra.mxu0 %v1010
    %1031 = vmatprep.subr.bf16.mxu0 0
    %1032 = vmatpush1.bf16.msra.mxu0 %v1011
    %1033 = vmatprep.subr.bf16.mxu0 0
    %1034 = vmatpush1.bf16.msra.mxu0 %v1012
    %1035 = vmatprep.subr.bf16.mxu0 0
    %1036 = vmatpush1.bf16.msra.mxu0 %v1013
    %1037 = vmatprep.subr.bf16.mxu0 0
    %1038 = vmatpush1.bf16.msra.mxu0 %v1014
    %1039 = vmatprep.subr.bf16.mxu0 0
    %1040 = vmatpush1.bf16.msra.mxu0 0
    %1041 = vmatprep.subr.bf16.mxu0 0
    %1042 = vmatpush1.bf16.msra.mxu0 0
    %1043 = vmatprep.subr.bf16.mxu0 0
    %1044 = vmatpush1.bf16.msra.mxu0 0
    %1045 = vmatprep.subr.bf16.mxu0 0
    %1046 = vmatpush1.bf16.msra.mxu0 0
    %1047 = vmatprep.subr.bf16.mxu0 0
    %1048 = vmatpush1.bf16.msra.mxu0 0
    %1049 = vmatprep.subr.bf16.mxu0 0
    %1050 = vmatpush1.bf16.msra.mxu0 0
    %1051 = vmatprep.subr.bf16.mxu0 0
    %1052 = vmatpush1.bf16.msra.mxu0 0
    %1053 = vmatprep.subr.bf16.mxu0 0
    %1054 = vmatpush1.bf16.msra.mxu0 0
    %1055 = vmatprep.mubr.bf16.mxu0 0
    %1056 = vmatmul.mubr.bf16.gmra.mrb[0].mxu0 %v950
    %v1057 = vpop.f32.mrb[0].mxu0
    %v1058 = vadd.f32 %v973, %v1057
    %v1059 = vpop.f32.mrb[0].mxu0
    %v1060 = vpop.f32.mrb[0].mxu0
    %v1061 = vadd.f32 %v973, %v1060
    %v1062 = vpop.f32.mrb[0].mxu0
    %1063 = vmatprep.mubr.bf16.mxu0 0
    %1064 = vmatmul.mubr.bf16.gmra.mrb[0].mxu0 %v951
    %v1065 = vpop.f32.mrb[0].mxu0
    %v1066 = vadd.f32 %v973, %v1065
    %v1067 = vpop.f32.mrb[0].mxu0
    %v1068 = vpop.f32.mrb[0].mxu0
    %v1069 = vadd.f32 %v973, %v1068
    %v1070 = vpop.f32.mrb[0].mxu0
    %1071 = vdwg.mxu0
    %1072 = vst [vmem:[#allocation10] sm:$0xff] %v1058
    %1073 = vst [vmem:[#allocation10 + $0x8] sm:$0xff] %v1061
    %1074 = vst [vmem:[#allocation10 + $0x10] sm:$0xff] %v1066
    %1075 = vst [vmem:[#allocation10 + $0x18] sm:$0xff] %v1069
    // Predicated region
    $region46: #{tpu_custom_call.1} parent=1 // pred_check
      _
    $region47: #{tpu_custom_call.1} parent=1 // pred_check_branch
      %1077 = sbr.rel (0) target = $region49
    $region48: #{tpu_custom_call.1} parent=1 // pred_region
      %s1079 = ssub.s32 512, 512
      %1080 = vsyncadd [#allocation4], %s1079
      %s1081 = sshll.u32 [#allocation10], 4
      %s1082 = int_to_ptr.vmem [resolvable:$true] %s1081
      %1087 = dma.vmem_to_hbm [thread:$0]  %s1082, 512, %s7, [#allocation4], 128, 128, 8
    $region49: #{tpu_custom_call.1} parent=1 // pred_fallthru
      _
    // Predicated region
    $region50: #{tpu_custom_call.1} parent=1 // pred_check
      _
    $region51: #{tpu_custom_call.1} parent=1 // pred_check_branch
      %1089 = sbr.rel (0) target = $region53
    $region52: #{tpu_custom_call.1} parent=1 // pred_region
      %1090 = dma.done [#allocation4], 512
    $region53: #{tpu_custom_call.1} parent=1 // pred_fallthru
      _
    %1091 = vsyncpa [#allocation3], 1
    %1092 = vsyncpa [#allocation6], 1
    %1093 = vsyncpa [#allocation9], 1
    %1094 = vsyncpa [#allocation4], 1

</llo_original>
